<compile_context>
chip_gen: v6e
topology: v6e:2x2x1
jax: 0.10.0
libtpu: 0.0.40
codegen_flags: <defaults>
</compile_context>

<pallas_src>
import functools

import jax
import jax.numpy as jnp
from jax import lax
from jax.experimental import pallas as pl
from jax.experimental.pallas import tpu as pltpu

LANES = 128
SUBLANES = 8


def sentiment_kernel(ids_ref, ew_ref, b_ref, out_ref):
    """Grid = (batch tiles,)  ["parallel"].

    ids_ref : (B_tile, S)     int32   token ids for this batch tile
    ew_ref  : (1, V_pad)      f32     folded table (emb @ fc_w), whole table resident
    b_ref   : (1, 1)          f32     fc bias (SMEM scalar)
    out_ref : (B_tile, 128)   f32     lane-dense output slab (every lane = prob)
    """
    ids = ids_ref[...]                      # (B_tile, S) int32
    b_tile, seq_len = ids.shape
    v_pad = ew_ref.shape[1]

    # Vocab ids along the lane axis, single sublane (keeps the iota at
    # v_pad/128 live vregs regardless of b_tile).
    vocab = lax.broadcasted_iota(jnp.int32, (1, v_pad), 1)

    # Token-count "bag" for this batch tile, accumulated in int32 and built one
    # sequence position at a time — never materializes a (B, S, V) one-hot.
    # seq_len is a compile-time constant, so this Python loop is fully unrolled.
    bag = jnp.zeros((b_tile, v_pad), jnp.int32)
    for s in range(seq_len):
        bag = bag + (ids[:, s:s + 1] == vocab).astype(jnp.int32)

    # VPU multiply + lane-axis (XLU) reduce replaces the ~0%-utilized MXU
    # matmul; padded vocab lanes have ew == 0 and count == 0, so they add 0.
    pooled = jnp.sum(bag.astype(jnp.float32) * ew_ref[...], axis=-1, keepdims=True)

    logits = pooled * (1.0 / seq_len) + b_ref[0, 0]
    out_ref[...] = jnp.broadcast_to(jax.nn.sigmoid(logits), out_ref.shape)


def _round_up(x, m):
    return (x + m - 1) // m * m


@functools.partial(jax.jit, static_argnames=("b_tile",))
def sentiment_classifier(ids, emb_table, fc_w, fc_b, *, b_tile=None):
    """ids: (B, S) int32; emb_table: (V, E); fc_w: (E, 1); fc_b: (1, 1) -> (B, 1)."""
    ids = ids.astype(jnp.int32)
    B, S = ids.shape
    V, _E = emb_table.shape

    # ---- Fold the Linear weight into the embedding table (one-time V*E flops):
    #      sigmoid(mean_s(emb[ids]) @ W + b) == sigmoid(mean_s(emb[ids] @ W) + b)
    ew = emb_table.astype(jnp.float32) @ fc_w.astype(jnp.float32)       # (V, 1)

    # ---- Lane-dense folded table: vocab on the lane axis, one sublane row. ----
    V_pad = _round_up(V, LANES)
    ew_row = jnp.zeros((1, V_pad), jnp.float32).at[0, :V].set(ew[:, 0])

    # ---- Batch tiling: large tiles, >=2 tiles when the batch allows (v7x 2-TC). ----
    if b_tile is None:
        b_tile = 128
    b_tile = _round_up(min(b_tile, _round_up(B, SUBLANES)), SUBLANES)
    B_pad = _round_up(B, b_tile)
    if B_pad // b_tile < 2 and B_pad >= 2 * SUBLANES:
        b_tile = _round_up(B_pad // 2, SUBLANES)
        B_pad = _round_up(B, b_tile)

    # Batch-pad the token ids with token 0 (padded rows are sliced away below).
    ids_pad = jnp.zeros((B_pad, S), jnp.int32).at[:B, :].set(ids)
    bias = jnp.asarray(fc_b, jnp.float32).reshape(1, 1)

    grid = (B_pad // b_tile,)

    out_pad = pl.pallas_call(
        sentiment_kernel,
        out_shape=jax.ShapeDtypeStruct((B_pad, LANES), jnp.float32),
        grid_spec=pltpu.PrefetchScalarGridSpec(
            num_scalar_prefetch=0,
            grid=grid,
            in_specs=[
                pl.BlockSpec((b_tile, S), lambda i: (i, 0)),     # token ids
                pl.BlockSpec((1, V_pad), lambda i: (0, 0)),      # folded table (resident)
                pl.BlockSpec(memory_space=pltpu.SMEM),           # fc bias scalar
            ],
            out_specs=pl.BlockSpec((b_tile, LANES), lambda i: (i, 0)),
        ),
        compiler_params=pltpu.CompilerParams(
            dimension_semantics=("parallel",),
            vmem_limit_bytes=32 * 1024 * 1024,
        ),
    )(ids_pad, ew_row, bias)

    # Column 0 of the lane-dense slab holds sigmoid(logit); drop all padding.
    return out_pad[:B, 0:1]


def reference(ids, emb_table, fc_w, fc_b):
    x = emb_table[ids]                 # (B, S, E)
    x = x.mean(axis=1)                 # (B, E)
    x = x @ fc_w + fc_b.reshape(1, 1)  # (B, 1)
    return jax.nn.sigmoid(x)


if __name__ == "__main__":
    # Small shapes consistent with the module.
    batch, seq = 2, 8
    vocab_size, embed_dim = 16, 10

    key = jax.random.PRNGKey(0)
    k_ids, k_emb, k_w, k_b = jax.random.split(key, 4)

    ids = jax.random.randint(k_ids, (batch, seq), 0, vocab_size, dtype=jnp.int32)
    emb_table = jax.random.normal(k_emb, (vocab_size, embed_dim), dtype=jnp.float32)
    fc_w = jax.random.normal(k_w, (embed_dim, 1), dtype=jnp.float32) * 0.1
    fc_b = jax.random.normal(k_b, (1, 1), dtype=jnp.float32) * 0.1

    out = jax.block_until_ready(sentiment_classifier(ids, emb_table, fc_w, fc_b))
    ref = reference(ids, emb_table, fc_w, fc_b)

    assert out.shape == (batch, 1), out.shape
    assert jnp.allclose(out, ref, atol=1e-5, rtol=1e-5), (out, ref)
    print("KERNEL_OK")
</pallas_src>

<mosaic_0001>
module attributes {stable_mosaic.version = 11 : i64} {
  func.func @sentiment_kernel(%arg0: i32, %arg1: memref<8x8xi32, #tpu.memory_space<vmem>>, %arg2: memref<1x128xf32, #tpu.memory_space<vmem>>, %arg3: memref<1x1xf32, #tpu.memory_space<smem>>, %arg4: memref<8x128xf32, #tpu.memory_space<vmem>>) attributes {dimension_semantics = [#tpu.dimension_semantics<parallel>], iteration_bounds = array<i64: 1>, scalar_prefetch = 0 : i64, scratch_operands = 0 : i64, tpu.core_type = #tpu.core_type<tc>, window_params = [{transform_indices = @transform_0, window_bounds = array<i64: 8, 8>}, {pipeline_mode = #tpu.pipeline_mode<synchronous>, transform_indices = @transform_1, window_bounds = array<i64: 1, 128>}, {transform_indices = @transform_2, window_bounds = array<i64: 1, 1>}, {transform_indices = @transform_3, window_bounds = array<i64: 8, 128>}]} {
    %c0 = arith.constant 0 : index
    %c0_0 = arith.constant 0 : index
    %0 = vector.load %arg1[%c0, %c0_0] : memref<8x8xi32, #tpu.memory_space<vmem>>, vector<8x8xi32>
    %1 = tpu.iota {dimensions = array<i32: 1>} : vector<1x128xi32>
    %c0_i32 = arith.constant 0 : i32
    %2 = vector.broadcast %c0_i32 : i32 to vector<8x128xi32>
    %3 = vector.extract_strided_slice %0 {offsets = [0, 0], sizes = [8, 1], strides = [1, 1]} : vector<8x8xi32> to vector<8x1xi32>
    %4 = vector.broadcast %3 : vector<8x1xi32> to vector<8x128xi32>
    %5 = vector.broadcast %1 : vector<1x128xi32> to vector<8x128xi32>
    %6 = arith.cmpi eq, %4, %5 : vector<8x128xi32>
    %7 = arith.extui %6 : vector<8x128xi1> to vector<8x128xi32>
    %8 = arith.addi %2, %7 : vector<8x128xi32>
    %9 = vector.extract_strided_slice %0 {offsets = [0, 1], sizes = [8, 1], strides = [1, 1]} : vector<8x8xi32> to vector<8x1xi32>
    %10 = vector.broadcast %9 : vector<8x1xi32> to vector<8x128xi32>
    %11 = vector.broadcast %1 : vector<1x128xi32> to vector<8x128xi32>
    %12 = arith.cmpi eq, %10, %11 : vector<8x128xi32>
    %13 = arith.extui %12 : vector<8x128xi1> to vector<8x128xi32>
    %14 = arith.addi %8, %13 : vector<8x128xi32>
    %15 = vector.extract_strided_slice %0 {offsets = [0, 2], sizes = [8, 1], strides = [1, 1]} : vector<8x8xi32> to vector<8x1xi32>
    %16 = vector.broadcast %15 : vector<8x1xi32> to vector<8x128xi32>
    %17 = vector.broadcast %1 : vector<1x128xi32> to vector<8x128xi32>
    %18 = arith.cmpi eq, %16, %17 : vector<8x128xi32>
    %19 = arith.extui %18 : vector<8x128xi1> to vector<8x128xi32>
    %20 = arith.addi %14, %19 : vector<8x128xi32>
    %21 = vector.extract_strided_slice %0 {offsets = [0, 3], sizes = [8, 1], strides = [1, 1]} : vector<8x8xi32> to vector<8x1xi32>
    %22 = vector.broadcast %21 : vector<8x1xi32> to vector<8x128xi32>
    %23 = vector.broadcast %1 : vector<1x128xi32> to vector<8x128xi32>
    %24 = arith.cmpi eq, %22, %23 : vector<8x128xi32>
    %25 = arith.extui %24 : vector<8x128xi1> to vector<8x128xi32>
    %26 = arith.addi %20, %25 : vector<8x128xi32>
    %27 = vector.extract_strided_slice %0 {offsets = [0, 4], sizes = [8, 1], strides = [1, 1]} : vector<8x8xi32> to vector<8x1xi32>
    %28 = vector.broadcast %27 : vector<8x1xi32> to vector<8x128xi32>
    %29 = vector.broadcast %1 : vector<1x128xi32> to vector<8x128xi32>
    %30 = arith.cmpi eq, %28, %29 : vector<8x128xi32>
    %31 = arith.extui %30 : vector<8x128xi1> to vector<8x128xi32>
    %32 = arith.addi %26, %31 : vector<8x128xi32>
    %33 = vector.extract_strided_slice %0 {offsets = [0, 5], sizes = [8, 1], strides = [1, 1]} : vector<8x8xi32> to vector<8x1xi32>
    %34 = vector.broadcast %33 : vector<8x1xi32> to vector<8x128xi32>
    %35 = vector.broadcast %1 : vector<1x128xi32> to vector<8x128xi32>
    %36 = arith.cmpi eq, %34, %35 : vector<8x128xi32>
    %37 = arith.extui %36 : vector<8x128xi1> to vector<8x128xi32>
    %38 = arith.addi %32, %37 : vector<8x128xi32>
    %39 = vector.extract_strided_slice %0 {offsets = [0, 6], sizes = [8, 1], strides = [1, 1]} : vector<8x8xi32> to vector<8x1xi32>
    %40 = vector.broadcast %39 : vector<8x1xi32> to vector<8x128xi32>
    %41 = vector.broadcast %1 : vector<1x128xi32> to vector<8x128xi32>
    %42 = arith.cmpi eq, %40, %41 : vector<8x128xi32>
    %43 = arith.extui %42 : vector<8x128xi1> to vector<8x128xi32>
    %44 = arith.addi %38, %43 : vector<8x128xi32>
    %45 = vector.extract_strided_slice %0 {offsets = [0, 7], sizes = [8, 1], strides = [1, 1]} : vector<8x8xi32> to vector<8x1xi32>
    %46 = vector.broadcast %45 : vector<8x1xi32> to vector<8x128xi32>
    %47 = vector.broadcast %1 : vector<1x128xi32> to vector<8x128xi32>
    %48 = arith.cmpi eq, %46, %47 : vector<8x128xi32>
    %49 = arith.extui %48 : vector<8x128xi1> to vector<8x128xi32>
    %50 = arith.addi %44, %49 : vector<8x128xi32>
    %51 = arith.sitofp %50 : vector<8x128xi32> to vector<8x128xf32>
    %c0_1 = arith.constant 0 : index
    %c0_2 = arith.constant 0 : index
    %52 = vector.load %arg2[%c0_1, %c0_2] : memref<1x128xf32, #tpu.memory_space<vmem>>, vector<1x128xf32>
    %53 = vector.broadcast %52 : vector<1x128xf32> to vector<8x128xf32>
    %54 = arith.mulf %51, %53 : vector<8x128xf32>
    %cst = arith.constant dense<0.000000e+00> : vector<8xf32>
    %55 = vector.multi_reduction <add>, %54, %cst [1] : vector<8x128xf32> to vector<8xf32>
    %56 = vector.shape_cast %55 : vector<8xf32> to vector<8x1xf32>
    %cst_3 = arith.constant 1.250000e-01 : f32
    %57 = vector.broadcast %cst_3 : f32 to vector<8x1xf32>
    %58 = arith.mulf %56, %57 : vector<8x1xf32>
    %c0_4 = arith.constant 0 : index
    %c0_5 = arith.constant 0 : index
    %59 = memref.load %arg3[%c0_4, %c0_5] : memref<1x1xf32, #tpu.memory_space<smem>>
    %60 = vector.broadcast %59 : f32 to vector<8x1xf32>
    %61 = arith.addf %58, %60 : vector<8x1xf32>
    %62 = arith.negf %61 : vector<8x1xf32>
    %63 = math.exp %62 : vector<8x1xf32>
    %cst_6 = arith.constant 1.000000e+00 : f32
    %64 = vector.broadcast %cst_6 : f32 to vector<8x1xf32>
    %65 = arith.addf %64, %63 : vector<8x1xf32>
    %66 = arith.divf %64, %65 : vector<8x1xf32>
    %67 = vector.shape_cast %66 : vector<8x1xf32> to vector<8x1xf32>
    %68 = vector.broadcast %67 : vector<8x1xf32> to vector<8x128xf32>
    %c0_7 = arith.constant 0 : index
    %c0_8 = arith.constant 0 : index
    %69 = vector.load %arg4[%c0_7, %c0_8] : memref<8x128xf32, #tpu.memory_space<vmem>>, vector<8x128xf32>
    tpu.vector_store %arg4[%c0_7, %c0_8], %68 {strides = array<i32>} : memref<8x128xf32, #tpu.memory_space<vmem>>, vector<8x128xf32>,
    return
  }
  func.func @transform_0(%arg0: i32) -> (i32, i32) {
    %c0_i32 = arith.constant 0 : i32
    %c0_i32_0 = arith.constant 0 : i32
    return %arg0, %c0_i32 : i32, i32
  }
  func.func @transform_1(%arg0: i32) -> (i32, i32) {
    %c0_i32 = arith.constant 0 : i32
    %c0_i32_0 = arith.constant 0 : i32
    %c0_i32_1 = arith.constant 0 : i32
    return %c0_i32, %c0_i32_0 : i32, i32
  }
  func.func @transform_2(%arg0: i32) -> (i32, i32) {
    %c0_i32 = arith.constant 0 : i32
    %c0_i32_0 = arith.constant 0 : i32
    %c0_i32_1 = arith.constant 0 : i32
    return %c0_i32, %c0_i32_0 : i32, i32
  }
  func.func @transform_3(%arg0: i32) -> (i32, i32) {
    %c0_i32 = arith.constant 0 : i32
    %c0_i32_0 = arith.constant 0 : i32
    return %arg0, %c0_i32 : i32, i32
  }
}

</mosaic_0001>

<llo_original>
// kernel: sentiment_classifier.1
$region0: #{sentiment_classifier.1}
  #allocation0 [shape = 'u32[]', space=smem, size = 0x4, offset = 0x4, fixed_abs, tag = 'smem constant byte address 0x4 - core index']
  #allocation1 [shape = 'u32[144,128]{1,0:T(1,128)}', space=vmem, size = 0x12000, scoped, tag = 'internal scratch']
  #allocation2 [shape = 'f32[1,1]{1,0:T(1,128)S(6)}', space=smem, size = 0x200, scoped, tag = 'scoped memory for sentiment_classifier.1']
  %s0 = inlined_call_operand.vmem [shape: s32[8,8], index: 0, kind: input, shape index: {}]
  %s1 = inlined_call_operand.vmem [shape: f32[1,128], index: 1, kind: input, shape index: {}]
  %s2 = inlined_call_operand.<no memory space> [shape: f32[1,1], index: 2, kind: input, shape index: {}]
  %s3 = inlined_call_operand.vmem [shape: f32[8,128], index: 3, kind: output, shape index: {}]
  %s4 = sld [smem:[#allocation0]]
  $region22: #{sentiment_classifier.1} parent=0
    _
  %s6 = ssub.s32 1, %s4
  %s7 = scalar_select 0, %s6, %s4
  %8 = sst [smem:[#allocation2]] %s2
  // Predicated region
  $region2: #{sentiment_classifier.1} parent=0 // pred_check
    _
  $region3: #{sentiment_classifier.1} parent=0 // pred_check_branch
    %10 = sbr.rel (0) target = $region5
  $region4: #{sentiment_classifier.1} parent=0 // pred_region
    _
  $region5: #{sentiment_classifier.1} parent=0 // pred_fallthru
    _
  // Predicated region
  $region6: #{sentiment_classifier.1} parent=0 // pred_check
    _
  $region7: #{sentiment_classifier.1} parent=0 // pred_check_branch
    %12 = sbr.rel (0) target = $region9
  $region8: #{sentiment_classifier.1} parent=0 // pred_region
    _
  $region9: #{sentiment_classifier.1} parent=0 // pred_fallthru
    _
  // Predicated region
  $region10: #{sentiment_classifier.1} parent=0 // pred_check
    _
  $region11: #{sentiment_classifier.1} parent=0 // pred_check_branch
    %14 = sbr.rel (0) target = $region13
  $region12: #{sentiment_classifier.1} parent=0 // pred_region
    _
  $region13: #{sentiment_classifier.1} parent=0 // pred_fallthru
    _
  %v15 = vld [vmem:[%s0] sm:$0xff]
  %v16 = vlaneseq
  %v17 = vand.u32 %v16, 127
  %18 = vset.pattern.permute.xlu0 0
  %19 = vperm.xlu0 %18, %v15
  %v20 = vpop.permute.xlu0 %19
  %vm21 = vcmp.eq.s32.totalorder %v20, %v17
  %v22 = vsel %vm21, 1, 0
  %23 = vset.pattern.permute.xlu0 1
  %24 = vperm.xlu0 %23, %v15
  %v25 = vpop.permute.xlu0 %24
  %vm26 = vcmp.eq.s32.totalorder %v25, %v17
  %v27 = vsel %vm26, 1, 0
  %v28 = vadd.s32 %v22, %v27
  %29 = vset.pattern.permute.xlu0 2
  %30 = vperm.xlu0 %29, %v15
  %v31 = vpop.permute.xlu0 %30
  %vm32 = vcmp.eq.s32.totalorder %v31, %v17
  %v33 = vsel %vm32, 1, 0
  %v34 = vadd.s32 %v28, %v33
  %35 = vset.pattern.permute.xlu0 3
  %36 = vperm.xlu0 %35, %v15
  %v37 = vpop.permute.xlu0 %36
  %vm38 = vcmp.eq.s32.totalorder %v37, %v17
  %v39 = vsel %vm38, 1, 0
  %v40 = vadd.s32 %v34, %v39
  %41 = vset.pattern.permute.xlu0 4
  %42 = vperm.xlu0 %41, %v15
  %v43 = vpop.permute.xlu0 %42
  %vm44 = vcmp.eq.s32.totalorder %v43, %v17
  %v45 = vsel %vm44, 1, 0
  %v46 = vadd.s32 %v40, %v45
  %47 = vset.pattern.permute.xlu0 5
  %48 = vperm.xlu0 %47, %v15
  %v49 = vpop.permute.xlu0 %48
  %vm50 = vcmp.eq.s32.totalorder %v49, %v17
  %v51 = vsel %vm50, 1, 0
  %v52 = vadd.s32 %v46, %v51
  %53 = vset.pattern.permute.xlu0 6
  %54 = vperm.xlu0 %53, %v15
  %v55 = vpop.permute.xlu0 %54
  %vm56 = vcmp.eq.s32.totalorder %v55, %v17
  %v57 = vsel %vm56, 1, 0
  %v58 = vadd.s32 %v52, %v57
  %59 = vset.pattern.permute.xlu0 7
  %60 = vperm.xlu0 %59, %v15
  %v61 = vpop.permute.xlu0 %60
  %vm62 = vcmp.eq.s32.totalorder %v61, %v17
  %v63 = vsel %vm62, 1, 0
  %v64 = vadd.s32 %v58, %v63
  %v65 = vcvt.s32.f32 %v64
  %v66 = vld [vmem:[%s1] sm:$0x1]
  %v68 = vlaneseq
  %v69 = vshrl.u32 %v68, 7
  %v70 = vsub.s32 0, %v69
  %v71 = vrot.slane %v66, %v70
  %v73 = vmul.f32 %v65, %v71
  %74 = vadd.xlane.f32.xlu0 %v73
  %v75 = vpop.xlane.xlu0 %74
  %v76 = vmul.f32 %v75, 0.125
  %s77 = sld [smem:[#allocation2]]
  %v78 = vstv %s77
  %v79 = vadd.f32 %v76, %v78
  %v80 = vxor.u32 %v79, 2147483648
  %v81 = vmul.f32 %v80, 1.442695
  %v82 = vpow.pop %v81
  %v83 = vadd.f32 %v82, 1.0
  %v84 = vrcp.pop %v83
  %v85 = vmul.f32 1.0, %v84
  %86 = vst [vmem:[%s3] sm:$0xff] %v85
  // Predicated region
  $region14: #{sentiment_classifier.1} parent=0 // pred_check
    _
  $region15: #{sentiment_classifier.1} parent=0 // pred_check_branch
    %88 = sbr.rel (0) target = $region17
  $region16: #{sentiment_classifier.1} parent=0 // pred_region
    _
  $region17: #{sentiment_classifier.1} parent=0 // pred_fallthru
    _
  // Predicated region
  $region18: #{sentiment_classifier.1} parent=0 // pred_check
    _
  $region19: #{sentiment_classifier.1} parent=0 // pred_check_branch
    %90 = sbr.rel (0) target = $region21
  $region20: #{sentiment_classifier.1} parent=0 // pred_region
    _
  $region21: #{sentiment_classifier.1} parent=0 // pred_fallthru
    _

</llo_original>
